<compile_context>
chip_gen: v7x
topology: tpu7x:2x2x1
jax: 0.10.0
libtpu: 0.0.40
codegen_flags: <defaults>
</compile_context>

<pallas_src>
import functools

import jax
import jax.numpy as jnp
from jax.experimental import pallas as pl
from jax.experimental.pallas import tpu as pltpu

N_EMBD = 128
N_HIDDEN = 4 * N_EMBD  # 512

_INV_SQRT2 = 0.7071067811865476
_SQRT_2_OVER_PI = 0.7978845608028654


def _gelu_exact(x):
    # nn.GELU() default: 0.5 * x * (1 + erf(x / sqrt(2)))
    return 0.5 * x * (1.0 + jax.lax.erf(x * _INV_SQRT2))


def _gelu_tanh(x):
    # tanh approximation; transcendental lands on the EUP slot (free filler).
    return 0.5 * x * (1.0 + jnp.tanh(_SQRT_2_OVER_PI * (x + 0.044715 * x * x * x)))


def mlp_kernel(x_ref, w1_ref, b1_ref, w2_ref, b2_ref, o_ref, *, approx_gelu):
    # x_ref:  (tm, C)   row tile of inputs (kept in caller dtype in HBM/VMEM)
    # w1_ref: (C, 4C)   c_fc weight, resident in VMEM  (stored (in, out))
    # b1_ref: (1, 4C)   c_fc bias (f32)
    # w2_ref: (4C, C)   c_proj weight, resident in VMEM
    # b2_ref: (1, C)    c_proj bias (f32)
    # Cast MXU operands to the weight dtype (bf16 by default -> single-pass
    # matmul); accumulation stays f32 via preferred_element_type.
    x = x_ref[...].astype(w1_ref.dtype)
    h = jnp.dot(x, w1_ref[...], preferred_element_type=jnp.float32)
    h = h + b1_ref[...].astype(jnp.float32)
    # GELU / bias in f32 (v5e has no bf16 VPU/EUP; f32 avoids pack/unpack).
    h = _gelu_tanh(h) if approx_gelu else _gelu_exact(h)
    h = h.astype(w2_ref.dtype)
    out = jnp.dot(h, w2_ref[...], preferred_element_type=jnp.float32)
    out = out + b2_ref[...].astype(jnp.float32)
    # dropout (p=0.2) in eval mode == identity
    o_ref[...] = out.astype(o_ref.dtype)


def _choose_tile(M, tm_target):
    """Pick the row tile.

    * Never larger than tm_target (default 4096: ~20 MiB VMEM footprint).
    * For small/medium M, aim for exactly 2 (even) grid steps so the
      'parallel' axis shards across both v7x TensorCores.
    * Always a multiple of 8 (sublane requirement for the (tm, 128) block).
    """
    tm_target = max(8, (tm_target // 8) * 8)
    tm_two_steps = ((pl.cdiv(M, 2) + 7) // 8) * 8  # even 2-way split, 8-aligned
    return max(8, min(tm_target, tm_two_steps))


def _vmem_limit_bytes(tm, in_bytes, out_bytes, op_bytes):
    est = (
        2 * tm * N_EMBD * in_bytes          # x tile, double buffered
        + 2 * tm * N_EMBD * out_bytes       # out tile, double buffered
        + tm * N_HIDDEN * 4                 # hidden activations (f32)
        + tm * N_HIDDEN * op_bytes          # hidden cast to matmul dtype
        + 2 * N_EMBD * N_HIDDEN * op_bytes  # W1 + W2 resident
        + (N_HIDDEN + N_EMBD) * 4           # biases
    )
    est = int(est * 1.5) + (4 << 20)        # headroom for Mosaic temporaries
    # >=32 MiB (v5e scoped default is only 16 MiB), <=48 MiB (v7x has 64 MiB/TC).
    return max(32 << 20, min(48 << 20, est))


@functools.partial(jax.jit, static_argnames=("tm", "use_bf16", "approx_gelu"))
def mlp_forward(x, w1, b1, w2, b2, *, tm=4096, use_bf16=True, approx_gelu=True):
    """x: (B, T, C) float32 (or bf16). Returns (B, T, C) in x.dtype.

    use_bf16=False / approx_gelu=False reproduce nn.Linear/nn.GELU() f32 math.
    """
    B, T, C = x.shape
    assert C == N_EMBD
    M = B * T
    x2d = x.reshape(M, C)                  # no copy
    b1_2d = b1.reshape(1, N_HIDDEN).astype(jnp.float32)
    b2_2d = b2.reshape(1, N_EMBD).astype(jnp.float32)

    if use_bf16:
        w1c = w1.astype(jnp.bfloat16)      # tiny (128x512): one-time 0.25 MiB cast
        w2c = w2.astype(jnp.bfloat16)
    else:
        w1c, w2c = w1, w2

    tile_m = _choose_tile(M, tm)
    grid = (pl.cdiv(M, tile_m),)           # tail tile masked by Pallas; no pad/slice

    in_bytes = x2d.dtype.itemsize
    out_bytes = x.dtype.itemsize
    op_bytes = w1c.dtype.itemsize
    cost = pl.CostEstimate(
        flops=4 * M * C * N_HIDDEN,        # two matmuls
        transcendentals=M * N_HIDDEN,      # one erf/tanh per hidden element
        bytes_accessed=(
            M * C * (in_bytes + out_bytes)         # x in, out out
            + 2 * C * N_HIDDEN * op_bytes          # W1 + W2
            + (N_HIDDEN + C) * 4                   # biases
        ),
    )

    out = pl.pallas_call(
        functools.partial(mlp_kernel, approx_gelu=approx_gelu),
        out_shape=jax.ShapeDtypeStruct((M, C), x.dtype),
        grid_spec=pltpu.PrefetchScalarGridSpec(
            num_scalar_prefetch=0,
            grid=grid,
            in_specs=[
                pl.BlockSpec((tile_m, C), lambda i: (i, 0)),           # x rows (pipelined)
                pl.BlockSpec(memory_space=pltpu.MemorySpace.VMEM),     # W1 resident
                pl.BlockSpec(memory_space=pltpu.MemorySpace.VMEM),     # b1 resident
                pl.BlockSpec(memory_space=pltpu.MemorySpace.VMEM),     # W2 resident
                pl.BlockSpec(memory_space=pltpu.MemorySpace.VMEM),     # b2 resident
            ],
            out_specs=pl.BlockSpec((tile_m, C), lambda i: (i, 0)),
        ),
        compiler_params=pltpu.CompilerParams(
            dimension_semantics=("parallel",),     # megacore sharding on v7x
            vmem_limit_bytes=_vmem_limit_bytes(tile_m, in_bytes, out_bytes, op_bytes),
        ),
        cost_estimate=cost,
    )(x2d, w1c, b1_2d, w2c, b2_2d)

    return out.reshape(B, T, C)


def reference_mlp(x, w1, b1, w2, b2):
    h = x @ w1 + b1.reshape(-1)
    h = _gelu_exact(h)
    return h @ w2 + b2.reshape(-1)


if __name__ == "__main__":
    key = jax.random.PRNGKey(0)
    k_x, k_w1, k_b1, k_w2, k_b2 = jax.random.split(key, 5)

    # Parameters stored transposed vs PyTorch nn.Linear ((in, out)) so the
    # kernel does x @ W directly.
    w1 = jax.random.normal(k_w1, (N_EMBD, N_HIDDEN), dtype=jnp.float32) * 0.02
    b1 = jax.random.normal(k_b1, (N_HIDDEN,), dtype=jnp.float32) * 0.02
    w2 = jax.random.normal(k_w2, (N_HIDDEN, N_EMBD), dtype=jnp.float32) * 0.02
    b2 = jax.random.normal(k_b2, (N_EMBD,), dtype=jnp.float32) * 0.02

    # --- Test 1: small shape, exact path (f32 operands, erf GELU) -----------
    B, T = 2, 8
    x_small = jax.random.normal(k_x, (B, T, N_EMBD), dtype=jnp.float32)
    out1 = jax.block_until_ready(
        mlp_forward(x_small, w1, b1, w2, b2, use_bf16=False, approx_gelu=False))
    ref1 = reference_mlp(x_small, w1, b1, w2, b2)
    assert out1.shape == (B, T, N_EMBD)
    assert jnp.allclose(out1, ref1, atol=1e-4, rtol=1e-4), "f32/erf small-shape mismatch"

    # --- Test 2: ragged M (no wrapper pad; Pallas masks tail tile), default
    #             fast path (bf16 operands + tanh GELU) ----------------------
    B2, T2 = 2, 333  # M = 666 -> tile ~336, grid = (2,), last tile masked
    x_big = jax.random.normal(k_x, (B2, T2, N_EMBD), dtype=jnp.float32)
    out2 = jax.block_until_ready(mlp_forward(x_big, w1, b1, w2, b2))
    ref2 = reference_mlp(x_big, w1, b1, w2, b2)
    assert out2.shape == (B2, T2, N_EMBD)
    assert jnp.allclose(out2, ref2, atol=3e-2, rtol=3e-2), "bf16/tanh path mismatch"

    # --- Test 3: ragged M with exact path -> tight tolerance proves the
    #             masked tail tile is handled correctly ----------------------
    out3 = jax.block_until_ready(
        mlp_forward(x_big, w1, b1, w2, b2, use_bf16=False, approx_gelu=False))
    assert jnp.allclose(out3, ref2, atol=2e-4, rtol=2e-4), "masked-tail mismatch"

    print("KERNEL_OK")
</pallas_src>

<mosaic_0001>
module attributes {stable_mosaic.version = 11 : i64} {
  func.func @mlp_kernel(%arg0: i32, %arg1: memref<8x128xf32, #tpu.memory_space<vmem>>, %arg2: memref<128x512xf32, #tpu.memory_space<vmem>>, %arg3: memref<1x512xf32, #tpu.memory_space<vmem>>, %arg4: memref<512x128xf32, #tpu.memory_space<vmem>>, %arg5: memref<1x128xf32, #tpu.memory_space<vmem>>, %arg6: memref<8x128xf32, #tpu.memory_space<vmem>>) attributes {dimension_semantics = [#tpu.dimension_semantics<parallel>], iteration_bounds = array<i64: 2>, scalar_prefetch = 0 : i64, scratch_operands = 0 : i64, tpu.core_type = #tpu.core_type<tc>, window_params = [{transform_indices = @transform_0, window_bounds = array<i64: 8, 128>}, {pipeline_mode = #tpu.pipeline_mode<synchronous>, transform_indices = @transform_1, window_bounds = array<i64: 128, 512>}, {pipeline_mode = #tpu.pipeline_mode<synchronous>, transform_indices = @transform_2, window_bounds = array<i64: 1, 512>}, {pipeline_mode = #tpu.pipeline_mode<synchronous>, transform_indices = @transform_3, window_bounds = array<i64: 512, 128>}, {pipeline_mode = #tpu.pipeline_mode<synchronous>, transform_indices = @transform_4, window_bounds = array<i64: 1, 128>}, {transform_indices = @transform_5, window_bounds = array<i64: 8, 128>}]} {
    %c0 = arith.constant 0 : index
    %c0_0 = arith.constant 0 : index
    %0 = vector.load %arg1[%c0, %c0_0] : memref<8x128xf32, #tpu.memory_space<vmem>>, vector<8x128xf32>
    %c0_1 = arith.constant 0 : index
    %c0_2 = arith.constant 0 : index
    %1 = vector.load %arg2[%c0_1, %c0_2] : memref<128x512xf32, #tpu.memory_space<vmem>>, vector<128x512xf32>
    %cst = arith.constant dense<0.000000e+00> : vector<8x512xf32>
    %2 = tpu.matmul %0, %1, %cst {dimension_numbers = #tpu.dot_dimension_numbers<[1], [0], [0], [1], [0, 0, 1, 1], [], []>} : vector<8x128xf32>, vector<128x512xf32>, vector<8x512xf32> -> vector<8x512xf32>
    %c0_3 = arith.constant 0 : index
    %c0_4 = arith.constant 0 : index
    %3 = vector.load %arg3[%c0_3, %c0_4] : memref<1x512xf32, #tpu.memory_space<vmem>>, vector<1x512xf32>
    %4 = vector.broadcast %3 : vector<1x512xf32> to vector<8x512xf32>
    %5 = arith.addf %2, %4 : vector<8x512xf32>
    %cst_5 = arith.constant 5.000000e-01 : f32
    %6 = vector.broadcast %cst_5 : f32 to vector<8x512xf32>
    %7 = arith.mulf %6, %5 : vector<8x512xf32>
    %cst_6 = arith.constant 0.707106769 : f32
    %8 = vector.broadcast %cst_6 : f32 to vector<8x512xf32>
    %9 = arith.mulf %5, %8 : vector<8x512xf32>
    %10 = math.erf %9 : vector<8x512xf32>
    %cst_7 = arith.constant 1.000000e+00 : f32
    %11 = vector.broadcast %cst_7 : f32 to vector<8x512xf32>
    %12 = arith.addf %11, %10 : vector<8x512xf32>
    %13 = arith.mulf %7, %12 : vector<8x512xf32>
    %c0_8 = arith.constant 0 : index
    %c0_9 = arith.constant 0 : index
    %14 = vector.load %arg4[%c0_8, %c0_9] : memref<512x128xf32, #tpu.memory_space<vmem>>, vector<512x128xf32>
    %cst_10 = arith.constant dense<0.000000e+00> : vector<8x128xf32>
    %15 = tpu.matmul %13, %14, %cst_10 {dimension_numbers = #tpu.dot_dimension_numbers<[1], [0], [0], [1], [0, 0, 1, 1], [], []>} : vector<8x512xf32>, vector<512x128xf32>, vector<8x128xf32> -> vector<8x128xf32>
    %c0_11 = arith.constant 0 : index
    %c0_12 = arith.constant 0 : index
    %16 = vector.load %arg5[%c0_11, %c0_12] : memref<1x128xf32, #tpu.memory_space<vmem>>, vector<1x128xf32>
    %17 = vector.broadcast %16 : vector<1x128xf32> to vector<8x128xf32>
    %18 = arith.addf %15, %17 : vector<8x128xf32>
    %c0_13 = arith.constant 0 : index
    %c0_14 = arith.constant 0 : index
    %19 = vector.load %arg6[%c0_13, %c0_14] : memref<8x128xf32, #tpu.memory_space<vmem>>, vector<8x128xf32>
    tpu.vector_store %arg6[%c0_13, %c0_14], %18 {strides = array<i32>} : memref<8x128xf32, #tpu.memory_space<vmem>>, vector<8x128xf32>,
    return
  }
  func.func @transform_0(%arg0: i32) -> (i32, i32) {
    %c0_i32 = arith.constant 0 : i32
    %c0_i32_0 = arith.constant 0 : i32
    return %arg0, %c0_i32 : i32, i32
  }
  func.func @transform_1(%arg0: i32) -> (i32, i32) {
    %c0_i32 = arith.constant 0 : i32
    %c0_i32_0 = arith.constant 0 : i32
    %c0_i32_1 = arith.constant 0 : i32
    return %c0_i32, %c0_i32_0 : i32, i32
  }
  func.func @transform_2(%arg0: i32) -> (i32, i32) {
    %c0_i32 = arith.constant 0 : i32
    %c0_i32_0 = arith.constant 0 : i32
    %c0_i32_1 = arith.constant 0 : i32
    return %c0_i32, %c0_i32_0 : i32, i32
  }
  func.func @transform_3(%arg0: i32) -> (i32, i32) {
    %c0_i32 = arith.constant 0 : i32
    %c0_i32_0 = arith.constant 0 : i32
    %c0_i32_1 = arith.constant 0 : i32
    return %c0_i32, %c0_i32_0 : i32, i32
  }
  func.func @transform_4(%arg0: i32) -> (i32, i32) {
    %c0_i32 = arith.constant 0 : i32
    %c0_i32_0 = arith.constant 0 : i32
    %c0_i32_1 = arith.constant 0 : i32
    return %c0_i32, %c0_i32_0 : i32, i32
  }
  func.func @transform_5(%arg0: i32) -> (i32, i32) {
    %c0_i32 = arith.constant 0 : i32
    %c0_i32_0 = arith.constant 0 : i32
    return %arg0, %c0_i32 : i32, i32
  }
}

</mosaic_0001>

<llo_original>
// kernel: mlp_forward.1
$region0: #{mlp_forward.1}
  #allocation0 [shape = 'u32[]', space=smem, size = 0x4, offset = 0x4, fixed_abs, tag = 'smem constant byte address 0x4 - core index']
  #allocation1 [shape = 'u32[144,128]{1,0:T(1,128)}', space=vmem, size = 0x12000, scoped, tag = 'internal scratch']
  %s0 = inlined_call_operand.hbm [shape: f32[16,128], index: 0, kind: input, shape index: {}]
  %s1 = inlined_call_operand.hbm [shape: f32[128,512], index: 1, kind: input, shape index: {}]
  %s2 = inlined_call_operand.vmem [shape: f32[1,512], index: 2, kind: input, shape index: {}]
  %s3 = inlined_call_operand.hbm [shape: f32[512,128], index: 3, kind: input, shape index: {}]
  %s4 = inlined_call_operand.vmem [shape: f32[1,128], index: 4, kind: input, shape index: {}]
  %s5 = inlined_call_operand.hbm [shape: f32[16,128], index: 5, kind: output, shape index: {}]
  %s6 = sld [smem:[#allocation0]]
  $region65: #{mlp_forward.1} parent=0
    _
  %s8 = ssub.s32 1, %s6
  %s9 = scalar_select 0, %s8, %s6
  $region1: #{mlp_forward.1} parent=0
    #allocation2 [shape = 'u8[8192]{0}', space=vmem, size = 0x2000, scoped, tag = 'input window, operand 0']
    #allocation3 [shape = 's32[2]{0}', space=sflag, size = 0x8, scoped, tag = 'scoped memory for mlp_forward.1']
    #allocation4 [shape = 's32[2]{0}', space=sflag, size = 0x8, scoped, tag = 'scoped memory for mlp_forward.1']
    #allocation5 [shape = 'u8[262144]{0}', space=vmem, size = 0x40000, scoped, tag = 'input window, operand 1, single buffered']
    #allocation6 [shape = 's32[1]{0}', space=sflag, size = 0x4, scoped, tag = 'scoped memory for mlp_forward.1']
    #allocation7 [shape = 'u8[262144]{0}', space=vmem, size = 0x40000, scoped, tag = 'input window, operand 3, single buffered']
    #allocation8 [shape = 'u8[8192]{0}', space=vmem, size = 0x2000, scoped, tag = 'output window, operand 0']
    %10 = vsyncpa [#allocation3], 0
    %s11 = scalar_lea.sflag [#allocation3], 1
    %12 = vsyncpa %s11, 0
    %13 = vsyncpa [#allocation6], 0
    %14 = vsyncpa [#allocation4], 0
    %s15 = scalar_lea.sflag [#allocation4], 1
    %16 = vsyncpa %s15, 0
    loop: start=0, step=1, limit=4
    $region2: #{mlp_forward.1} parent=1 // loop_pre_header
      _
    $region3: #{mlp_forward.1} parent=1 // loop_header
      %s18 = sphi 0, %s22
      %p19 = scmp.ge.s32.totalorder %s18, 4
      %s28 = sphi 0, %s30
      %s31 = sphi 0, %s28
      %s32 = sphi 0, %s31
      %s48 = sphi 0, %s32
      %s52 = sphi 0, %s52
      %s54 = sphi 0, %s52
      %s55 = sphi 0, %s54
      %s69 = sphi 0, %s55
      %s73 = sphi 0, %s73
      %s75 = sphi 0, %s73
      %s76 = sphi 0, %s75
      %s90 = sphi 0, %s76
      %s94 = sphi 0, %s94
      %s96 = sphi 0, %s94
      %s97 = sphi 0, %s96
      %s111 = sphi 0, %s97
      %s115 = sphi 0, %s115
      %s117 = sphi 0, %s115
      %s118 = sphi 0, %s117
      %s132 = sphi 0, %s118
      %s138 = sphi 0, %s140
      %s141 = sphi 0, %s138
      %s142 = sphi 0, %s141
      %s158 = sphi 0, %s142
    $region4: #{mlp_forward.1} parent=1 // loop_header_branch
      %21 = sbr.rel (%p19) target = $region8
    $region5: #{mlp_forward.1} parent=1 // loop_body
      %s23 = ssub.s32 %s18, 1
      %s24 = ssub.s32 %s18, 2
      %s25 = sadd.s32 %s18, 1
      %s26 = ssub.s32 %s18, %s25
      %p27 = scmp.eq.s32.totalorder %s26, 0
      %s29 = sadd.s32 %s28, 1
      %s30 = scalar_select %p27, %s28, %s29
      %p33 = pneg %p27
      %p34 = scmp.eq.s32.totalorder %s18, 1
      %p35 = por %p33, %p34
      %p36 = scmp.ne.s32.totalorder %s28, %s31
      %p37 = scmp.eq.s32.totalorder %s18, 0
      %p38 = por %p36, %p37
      %p39 = scmp.ne.s32.totalorder %s28, %s31
      %p40 = scmp.eq.s32.totalorder %s23, 1
      %p41 = por %p39, %p40
      %p42 = scmp.ne.s32.totalorder %s31, %s32
      %p43 = scmp.eq.s32.totalorder %s23, 0
      %p44 = por %p42, %p43
      %p45 = scmp.ne.s32.totalorder %s31, %s32
      %p46 = scmp.eq.s32.totalorder %s24, 1
      %p47 = por %p45, %p46
      %p49 = scmp.ne.s32.totalorder %s32, %s48
      %p50 = scmp.eq.s32.totalorder %s24, 0
      %p51 = por %p49, %p50
      %s53 = sadd.s32 %s52, 1
      %p56 = scmp.eq.s32.totalorder %s18, 1
      %p57 = scmp.ne.s32.totalorder %s52, %s54
      %p58 = scmp.eq.s32.totalorder %s18, 0
      %p59 = por %p57, %p58
      %p60 = scmp.ne.s32.totalorder %s52, %s54
      %p61 = scmp.eq.s32.totalorder %s23, 1
      %p62 = por %p60, %p61
      %p63 = scmp.ne.s32.totalorder %s54, %s55
      %p64 = scmp.eq.s32.totalorder %s23, 0
      %p65 = por %p63, %p64
      %p66 = scmp.ne.s32.totalorder %s54, %s55
      %p67 = scmp.eq.s32.totalorder %s24, 1
      %p68 = por %p66, %p67
      %p70 = scmp.ne.s32.totalorder %s55, %s69
      %p71 = scmp.eq.s32.totalorder %s24, 0
      %p72 = por %p70, %p71
      %s74 = sadd.s32 %s73, 1
      %p77 = scmp.eq.s32.totalorder %s18, 1
      %p78 = scmp.ne.s32.totalorder %s73, %s75
      %p79 = scmp.eq.s32.totalorder %s18, 0
      %p80 = por %p78, %p79
      %p81 = scmp.ne.s32.totalorder %s73, %s75
      %p82 = scmp.eq.s32.totalorder %s23, 1
      %p83 = por %p81, %p82
      %p84 = scmp.ne.s32.totalorder %s75, %s76
      %p85 = scmp.eq.s32.totalorder %s23, 0
      %p86 = por %p84, %p85
      %p87 = scmp.ne.s32.totalorder %s75, %s76
      %p88 = scmp.eq.s32.totalorder %s24, 1
      %p89 = por %p87, %p88
      %p91 = scmp.ne.s32.totalorder %s76, %s90
      %p92 = scmp.eq.s32.totalorder %s24, 0
      %p93 = por %p91, %p92
      %s95 = sadd.s32 %s94, 1
      %p98 = scmp.eq.s32.totalorder %s18, 1
      %p99 = scmp.ne.s32.totalorder %s94, %s96
      %p100 = scmp.eq.s32.totalorder %s18, 0
      %p101 = por %p99, %p100
      %p102 = scmp.ne.s32.totalorder %s94, %s96
      %p103 = scmp.eq.s32.totalorder %s23, 1
      %p104 = por %p102, %p103
      %p105 = scmp.ne.s32.totalorder %s96, %s97
      %p106 = scmp.eq.s32.totalorder %s23, 0
      %p107 = por %p105, %p106
      %p108 = scmp.ne.s32.totalorder %s96, %s97
      %p109 = scmp.eq.s32.totalorder %s24, 1
      %p110 = por %p108, %p109
      %p112 = scmp.ne.s32.totalorder %s97, %s111
      %p113 = scmp.eq.s32.totalorder %s24, 0
      %p114 = por %p112, %p113
      %s116 = sadd.s32 %s115, 1
      %p119 = scmp.eq.s32.totalorder %s18, 1
      %p120 = scmp.ne.s32.totalorder %s115, %s117
      %p121 = scmp.eq.s32.totalorder %s18, 0
      %p122 = por %p120, %p121
      %p123 = scmp.ne.s32.totalorder %s115, %s117
      %p124 = scmp.eq.s32.totalorder %s23, 1
      %p125 = por %p123, %p124
      %p126 = scmp.ne.s32.totalorder %s117, %s118
      %p127 = scmp.eq.s32.totalorder %s23, 0
      %p128 = por %p126, %p127
      %p129 = scmp.ne.s32.totalorder %s117, %s118
      %p130 = scmp.eq.s32.totalorder %s24, 1
      %p131 = por %p129, %p130
      %p133 = scmp.ne.s32.totalorder %s118, %s132
      %p134 = scmp.eq.s32.totalorder %s24, 0
      %p135 = por %p133, %p134
      %s136 = ssub.s32 %s18, %s25
      %p137 = scmp.eq.s32.totalorder %s136, 0
      %s139 = sadd.s32 %s138, 1
      %s140 = scalar_select %p137, %s138, %s139
      %p143 = pneg %p137
      %p144 = scmp.eq.s32.totalorder %s18, 1
      %p145 = por %p143, %p144
      %p146 = scmp.ne.s32.totalorder %s138, %s141
      %p147 = scmp.eq.s32.totalorder %s18, 0
      %p148 = por %p146, %p147
      %p149 = scmp.ne.s32.totalorder %s138, %s141
      %p150 = scmp.eq.s32.totalorder %s23, 1
      %p151 = por %p149, %p150
      %p152 = scmp.ne.s32.totalorder %s141, %s142
      %p153 = scmp.eq.s32.totalorder %s23, 0
      %p154 = por %p152, %p153
      %p155 = scmp.ne.s32.totalorder %s141, %s142
      %p156 = scmp.eq.s32.totalorder %s24, 1
      %p157 = por %p155, %p156
      %p159 = scmp.ne.s32.totalorder %s142, %s158
      %p160 = scmp.eq.s32.totalorder %s24, 0
      %p161 = por %p159, %p160
      %p162 = scmp.le.s32.totalorder 1, %s18
      %p163 = scmp.lt.s32.totalorder %s18, 3
      %p164 = pnand %p162, %p163
      %p165 = pneg %p164
      // Predicated region
      $region9: #{mlp_forward.1} parent=5 // pred_check
        _
      $region10: #{mlp_forward.1} parent=5 // pred_check_branch
        %167 = sbr.rel (%p164) target = $region12
      $region11: #{mlp_forward.1} parent=5 // pred_region
        %s168 = ssub.s32 %s18, 1
        // Predicated region
        $region13: #{mlp_forward.1} parent=11 // pred_check
          %p169 = pneg %p65
        $region14: #{mlp_forward.1} parent=11 // pred_check_branch
          %171 = sbr.rel (%p169) target = $region16
        $region15: #{mlp_forward.1} parent=11 // pred_region
          %s173 = ssub.s32 8192, 8192
          %174 = vsyncadd [#allocation6], %s173
          %s175 = sshll.u32 [#allocation5], 4
          %s176 = int_to_ptr.vmem [resolvable:$true] %s175
          %181 = dma.hbm_to_vmem [thread:$0]  %s1, 8192, %s176, [#allocation6], 512, 512, 32
        $region16: #{mlp_forward.1} parent=11 // pred_fallthru
          _
        // Predicated region
        $region17: #{mlp_forward.1} parent=11 // pred_check
          %p182 = pneg %p86
        $region18: #{mlp_forward.1} parent=11 // pred_check_branch
          %184 = sbr.rel (%p182) target = $region20
        $region19: #{mlp_forward.1} parent=11 // pred_region
          _
        $region20: #{mlp_forward.1} parent=11 // pred_fallthru
          _
        // Predicated region
        $region21: #{mlp_forward.1} parent=11 // pred_check
          %p185 = pneg %p107
        $region22: #{mlp_forward.1} parent=11 // pred_check_branch
          %187 = sbr.rel (%p185) target = $region24
        $region23: #{mlp_forward.1} parent=11 // pred_region
          %s189 = ssub.s32 8192, 8192
          %190 = vsyncadd [#allocation6], %s189
          %s191 = sshll.u32 [#allocation7], 4
          %s192 = int_to_ptr.vmem [resolvable:$true] %s191
          %197 = dma.hbm_to_vmem [thread:$0]  %s3, 8192, %s192, [#allocation6], 128, 128, 8
        $region24: #{mlp_forward.1} parent=11 // pred_fallthru
          _
        // Predicated region
        $region25: #{mlp_forward.1} parent=11 // pred_check
          %p198 = pneg %p128
        $region26: #{mlp_forward.1} parent=11 // pred_check_branch
          %200 = sbr.rel (%p198) target = $region28
        $region27: #{mlp_forward.1} parent=11 // pred_region
          _
        $region28: #{mlp_forward.1} parent=11 // pred_fallthru
          _
      $region12: #{mlp_forward.1} parent=5 // pred_fallthru
        _
      %p201 = scmp.lt.s32.totalorder %s18, 2
      // Predicated region
      $region29: #{mlp_forward.1} parent=5 // pred_check
        %p202 = pneg %p201
      $region30: #{mlp_forward.1} parent=5 // pred_check_branch
        %204 = sbr.rel (%p202) target = $region32
      $region31: #{mlp_forward.1} parent=5 // pred_region
        // Predicated region
        $region33: #{mlp_forward.1} parent=31 // pred_check
          %p205 = pneg %p38
        $region34: #{mlp_forward.1} parent=31 // pred_check_branch
          %207 = sbr.rel (%p205) target = $region36
        $region35: #{mlp_forward.1} parent=31 // pred_region
          %s208 = sand.u32 %s28, 1
          %s209 = scalar_lea.sflag [#allocation3], %s208
          %s210 = sand.u32 %s28, 1
          %s211 = smul.addr %s210, 8
          %s212 = scalar_lea.vmem [#allocation2], %s211
          %s214 = ssub.s32 128, 128
          %215 = vsyncadd %s209, %s214
          %s216 = smul.addr %s18, 128
          %s217 = scalar_lea.hbm %s0, %s216
          %s219 = sshll.u32 %s212, 4
          %s220 = int_to_ptr.vmem [resolvable:$true] %s219
          %222 = dma.hbm_to_vmem [thread:$0]  %s217, 128, %s220, %s209
        $region36: #{mlp_forward.1} parent=31 // pred_fallthru
          _
      $region32: #{mlp_forward.1} parent=5 // pred_fallthru
        _
      %p223 = scmp.le.s32.totalorder 1, %s18
      %p224 = scmp.lt.s32.totalorder %s18, 3
      %p225 = pnand %p223, %p224
      %p226 = pneg %p225
      // Predicated region
      $region37: #{mlp_forward.1} parent=5 // pred_check
        _
      $region38: #{mlp_forward.1} parent=5 // pred_check_branch
        %228 = sbr.rel (%p225) target = $region40
      $region39: #{mlp_forward.1} parent=5 // pred_region
        %s229 = ssub.s32 %s18, 1
        %s230 = sand.u32 %s31, 1
        %s231 = scalar_lea.sflag [#allocation3], %s230
        %s232 = sand.u32 %s31, 1
        %s233 = smul.addr %s232, 8
        %s234 = scalar_lea.vmem [#allocation2], %s233
        // Predicated region
        $region41: #{mlp_forward.1} parent=39 // pred_check
          %p235 = pneg %p44
        $region42: #{mlp_forward.1} parent=39 // pred_check_branch
          %237 = sbr.rel (%p235) target = $region44
        $region43: #{mlp_forward.1} parent=39 // pred_region
          %238 = dma.done %s231, 128
        $region44: #{mlp_forward.1} parent=39 // pred_fallthru
          _
        // Predicated region
        $region45: #{mlp_forward.1} parent=39 // pred_check
          %p239 = pneg %p65
        $region46: #{mlp_forward.1} parent=39 // pred_check_branch
          %241 = sbr.rel (%p239) target = $region48
        $region47: #{mlp_forward.1} parent=39 // pred_region
          %242 = dma.done [#allocation6], 8192
        $region48: #{mlp_forward.1} parent=39 // pred_fallthru
          _
        // Predicated region
        $region49: #{mlp_forward.1} parent=39 // pred_check
          %p243 = pneg %p107
        $region50: #{mlp_forward.1} parent=39 // pred_check_branch
          %245 = sbr.rel (%p243) target = $region52
        $region51: #{mlp_forward.1} parent=39 // pred_region
          %246 = dma.done [#allocation6], 8192
        $region52: #{mlp_forward.1} parent=39 // pred_fallthru
          _
        %s247 = sand.u32 %s31, 1
        %s248 = scalar_lea.sflag [#allocation3], %s247
        %s249 = sand.u32 %s31, 1
        %s250 = smul.addr %s249, 8
        %s251 = scalar_lea.vmem [#allocation2], %s250
        %p252 = pneg %p44
        %p253 = pneg %p41
        %p254 = pneg %p65
        %p255 = pneg %p62
        %p256 = pneg %p86
        %p257 = pneg %p83
        %p258 = pneg %p107
        %p259 = pneg %p104
        %p260 = pneg %p128
        %p261 = pneg %p125
        %p262 = pneg %p154
        %p263 = pneg %p151
        %s264 = sand.u32 %s141, 1
        %s265 = scalar_lea.sflag [#allocation4], %s264
        %s266 = sand.u32 %s141, 1
        %s267 = smul.addr %s266, 8
        %s268 = scalar_lea.vmem [#allocation8], %s267
        %v269 = vld [vmem:[%s234] sm:$0xff]
        %v270 = vld [vmem:[#allocation5] sm:$0xff]
        %v271 = vld [vmem:[#allocation5 + $0x8] sm:$0xff]
        %v272 = vld [vmem:[#allocation5 + $0x10] sm:$0xff]
        %v273 = vld [vmem:[#allocation5 + $0x18] sm:$0xff]
        %v274 = vld [vmem:[#allocation5 + $0x20] sm:$0xff]
        %v275 = vld [vmem:[#allocation5 + $0x28] sm:$0xff]
        %v276 = vld [vmem:[#allocation5 + $0x30] sm:$0xff]
        %v277 = vld [vmem:[#allocation5 + $0x38] sm:$0xff]
        %v278 = vld [vmem:[#allocation5 + $0x40] sm:$0xff]
        %v279 = vld [vmem:[#allocation5 + $0x48] sm:$0xff]
        %v280 = vld [vmem:[#allocation5 + $0x50] sm:$0xff]
        %v281 = vld [vmem:[#allocation5 + $0x58] sm:$0xff]
        %v282 = vld [vmem:[#allocation5 + $0x60] sm:$0xff]
        %v283 = vld [vmem:[#allocation5 + $0x68] sm:$0xff]
        %v284 = vld [vmem:[#allocation5 + $0x70] sm:$0xff]
        %v285 = vld [vmem:[#allocation5 + $0x78] sm:$0xff]
        %v286 = vld [vmem:[#allocation5 + $0x80] sm:$0xff]
        %v287 = vld [vmem:[#allocation5 + $0x88] sm:$0xff]
        %v288 = vld [vmem:[#allocation5 + $0x90] sm:$0xff]
        %v289 = vld [vmem:[#allocation5 + $0x98] sm:$0xff]
        %v290 = vld [vmem:[#allocation5 + $0xa0] sm:$0xff]
        %v291 = vld [vmem:[#allocation5 + $0xa8] sm:$0xff]
        %v292 = vld [vmem:[#allocation5 + $0xb0] sm:$0xff]
        %v293 = vld [vmem:[#allocation5 + $0xb8] sm:$0xff]
        %v294 = vld [vmem:[#allocation5 + $0xc0] sm:$0xff]
        %v295 = vld [vmem:[#allocation5 + $0xc8] sm:$0xff]
        %v296 = vld [vmem:[#allocation5 + $0xd0] sm:$0xff]
        %v297 = vld [vmem:[#allocation5 + $0xd8] sm:$0xff]
        %v298 = vld [vmem:[#allocation5 + $0xe0] sm:$0xff]
        %v299 = vld [vmem:[#allocation5 + $0xe8] sm:$0xff]
        %v300 = vld [vmem:[#allocation5 + $0xf0] sm:$0xff]
        %v301 = vld [vmem:[#allocation5 + $0xf8] sm:$0xff]
        %v302 = vld [vmem:[#allocation5 + $0x100] sm:$0xff]
        %v303 = vld [vmem:[#allocation5 + $0x108] sm:$0xff]
        %v304 = vld [vmem:[#allocation5 + $0x110] sm:$0xff]
        %v305 = vld [vmem:[#allocation5 + $0x118] sm:$0xff]
        %v306 = vld [vmem:[#allocation5 + $0x120] sm:$0xff]
        %v307 = vld [vmem:[#allocation5 + $0x128] sm:$0xff]
        %v308 = vld [vmem:[#allocation5 + $0x130] sm:$0xff]
        %v309 = vld [vmem:[#allocation5 + $0x138] sm:$0xff]
        %v310 = vld [vmem:[#allocation5 + $0x140] sm:$0xff]
        %v311 = vld [vmem:[#allocation5 + $0x148] sm:$0xff]
        %v312 = vld [vmem:[#allocation5 + $0x150] sm:$0xff]
        %v313 = vld [vmem:[#allocation5 + $0x158] sm:$0xff]
        %v314 = vld [vmem:[#allocation5 + $0x160] sm:$0xff]
        %v315 = vld [vmem:[#allocation5 + $0x168] sm:$0xff]
        %v316 = vld [vmem:[#allocation5 + $0x170] sm:$0xff]
        %v317 = vld [vmem:[#allocation5 + $0x178] sm:$0xff]
        %v318 = vld [vmem:[#allocation5 + $0x180] sm:$0xff]
        %v319 = vld [vmem:[#allocation5 + $0x188] sm:$0xff]
        %v320 = vld [vmem:[#allocation5 + $0x190] sm:$0xff]
        %v321 = vld [vmem:[#allocation5 + $0x198] sm:$0xff]
        %v322 = vld [vmem:[#allocation5 + $0x1a0] sm:$0xff]
        %v323 = vld [vmem:[#allocation5 + $0x1a8] sm:$0xff]
        %v324 = vld [vmem:[#allocation5 + $0x1b0] sm:$0xff]
        %v325 = vld [vmem:[#allocation5 + $0x1b8] sm:$0xff]
        %v326 = vld [vmem:[#allocation5 + $0x1c0] sm:$0xff]
        %v327 = vld [vmem:[#allocation5 + $0x1c8] sm:$0xff]
        %v328 = vld [vmem:[#allocation5 + $0x1d0] sm:$0xff]
        %v329 = vld [vmem:[#allocation5 + $0x1d8] sm:$0xff]
        %v330 = vld [vmem:[#allocation5 + $0x1e0] sm:$0xff]
        %v331 = vld [vmem:[#allocation5 + $0x1e8] sm:$0xff]
        %v332 = vld [vmem:[#allocation5 + $0x1f0] sm:$0xff]
        %v333 = vld [vmem:[#allocation5 + $0x1f8] sm:$0xff]
        %v334 = vld [vmem:[%s2] sm:$0xf]
        %v336 = vlaneseq
        %v337 = vshrl.u32 %v336, 7
        %v338 = vsub.s32 0, %v337
        %v339 = vrot.slane %v334, %v338
        %v340 = vlaneseq
        %v341 = vshrl.u32 %v340, 7
        %v342 = vsub.s32 1, %v341
        %v343 = vrot.slane %v334, %v342
        %v344 = vlaneseq
        %v345 = vshrl.u32 %v344, 7
        %v346 = vsub.s32 2, %v345
        %v347 = vrot.slane %v334, %v346
        %v348 = vlaneseq
        %v349 = vshrl.u32 %v348, 7
        %v350 = vsub.s32 3, %v349
        %v351 = vrot.slane %v334, %v350
        %356 = vmatprep.subr.mxu0 %v271
        %357 = vmatpush1.msra.mxu0 %v270
        %358 = vmatprep.subr.mxu0 %v275
        %359 = vmatpush1.msra.mxu0 %v274
        %360 = vmatprep.subr.mxu0 %v279
        %361 = vmatpush1.msra.mxu0 %v278
        %362 = vmatprep.subr.mxu0 %v283
        %363 = vmatpush1.msra.mxu0 %v282
        %364 = vmatprep.subr.mxu0 %v287
        %365 = vmatpush1.msra.mxu0 %v286
        %366 = vmatprep.subr.mxu0 %v291
        %367 = vmatpush1.msra.mxu0 %v290
        %368 = vmatprep.subr.mxu0 %v295
        %369 = vmatpush1.msra.mxu0 %v294
        %370 = vmatprep.subr.mxu0 %v299
        %371 = vmatpush1.msra.mxu0 %v298
        %372 = vmatprep.subr.mxu0 %v303
        %373 = vmatpush1.msra.mxu0 %v302
        %374 = vmatprep.subr.mxu0 %v307
        %375 = vmatpush1.msra.mxu0 %v306
        %376 = vmatprep.subr.mxu0 %v311
        %377 = vmatpush1.msra.mxu0 %v310
        %378 = vmatprep.subr.mxu0 %v315
        %379 = vmatpush1.msra.mxu0 %v314
        %380 = vmatprep.subr.mxu0 %v319
        %381 = vmatpush1.msra.mxu0 %v318
        %382 = vmatprep.subr.mxu0 %v323
        %383 = vmatpush1.msra.mxu0 %v322
        %384 = vmatprep.subr.mxu0 %v327
        %385 = vmatpush1.msra.mxu0 %v326
        %386 = vmatprep.subr.mxu0 %v331
        %387 = vmatpush1.msra.mxu0 %v330
        %388 = vmatprep.subr.mxu0 0.0
        %389 = vmatpush1.msra.mxu0 0.0
        %390 = vmatprep.subr.mxu0 0.0
        %391 = vmatpush1.msra.mxu0 0.0
        %392 = vmatprep.subr.mxu0 0.0
        %393 = vmatpush1.msra.mxu0 0.0
        %394 = vmatprep.subr.mxu0 0.0
        %395 = vmatpush1.msra.mxu0 0.0
        %396 = vmatprep.subr.mxu0 0.0
        %397 = vmatpush1.msra.mxu0 0.0
        %398 = vmatprep.subr.mxu0 0.0
        %399 = vmatpush1.msra.mxu0 0.0
        %400 = vmatprep.subr.mxu0 0.0
        %401 = vmatpush1.msra.mxu0 0.0
        %402 = vmatprep.subr.mxu0 0.0
        %403 = vmatpush1.msra.mxu0 0.0
        %404 = vmatprep.subr.mxu0 0.0
        %405 = vmatpush1.msra.mxu0 0.0
        %406 = vmatprep.subr.mxu0 0.0
        %407 = vmatpush1.msra.mxu0 0.0
        %408 = vmatprep.subr.mxu0 0.0
        %409 = vmatpush1.msra.mxu0 0.0
        %410 = vmatprep.subr.mxu0 0.0
        %411 = vmatpush1.msra.mxu0 0.0
        %412 = vmatprep.subr.mxu0 0.0
        %413 = vmatpush1.msra.mxu0 0.0
        %414 = vmatprep.subr.mxu0 0.0
        %415 = vmatpush1.msra.mxu0 0.0
        %416 = vmatprep.subr.mxu0 0.0
        %417 = vmatpush1.msra.mxu0 0.0
        %418 = vmatprep.subr.mxu0 0.0
        %419 = vmatpush1.msra.mxu0 0.0
        %420 = vmatprep.mubr.f32.mxu0 0.0
        %421 = vmatmul.mubr.f32.gmra.mrb[0].mxu0 %v269
        %v422 = vpop.f32.mrb[0].mxu0
        %v423 = vadd.f32 %v339, %v422
        %v424 = vpop.f32.mrb[0].mxu0
        %v425 = vadd.f32 %v343, %v424
        %426 = vdwg.mxu0
        %427 = vmatprep.subr.mxu0 %v273
        %428 = vmatpush1.msra.mxu0 %v272
        %429 = vmatprep.subr.mxu0 %v277
        %430 = vmatpush1.msra.mxu0 %v276
        %431 = vmatprep.subr.mxu0 %v281
        %432 = vmatpush1.msra.mxu0 %v280
        %433 = vmatprep.subr.mxu0 %v285
        %434 = vmatpush1.msra.mxu0 %v284
        %435 = vmatprep.subr.mxu0 %v289
        %436 = vmatpush1.msra.mxu0 %v288
        %437 = vmatprep.subr.mxu0 %v293
        %438 = vmatpush1.msra.mxu0 %v292
        %439 = vmatprep.subr.mxu0 %v297
        %440 = vmatpush1.msra.mxu0 %v296
        %441 = vmatprep.subr.mxu0 %v301
        %442 = vmatpush1.msra.mxu0 %v300
        %443 = vmatprep.subr.mxu0 %v305
        %444 = vmatpush1.msra.mxu0 %v304
        %445 = vmatprep.subr.mxu0 %v309
        %446 = vmatpush1.msra.mxu0 %v308
        %447 = vmatprep.subr.mxu0 %v313
        %448 = vmatpush1.msra.mxu0 %v312
        %449 = vmatprep.subr.mxu0 %v317
        %450 = vmatpush1.msra.mxu0 %v316
        %451 = vmatprep.subr.mxu0 %v321
        %452 = vmatpush1.msra.mxu0 %v320
        %453 = vmatprep.subr.mxu0 %v325
        %454 = vmatpush1.msra.mxu0 %v324
        %455 = vmatprep.subr.mxu0 %v329
        %456 = vmatpush1.msra.mxu0 %v328
        %457 = vmatprep.subr.mxu0 %v333
        %458 = vmatpush1.msra.mxu0 %v332
        %459 = vmatprep.subr.mxu0 0.0
        %460 = vmatpush1.msra.mxu0 0.0
        %461 = vmatprep.subr.mxu0 0.0
        %462 = vmatpush1.msra.mxu0 0.0
        %463 = vmatprep.subr.mxu0 0.0
        %464 = vmatpush1.msra.mxu0 0.0
        %465 = vmatprep.subr.mxu0 0.0
        %466 = vmatpush1.msra.mxu0 0.0
        %467 = vmatprep.subr.mxu0 0.0
        %468 = vmatpush1.msra.mxu0 0.0
        %469 = vmatprep.subr.mxu0 0.0
        %470 = vmatpush1.msra.mxu0 0.0
        %471 = vmatprep.subr.mxu0 0.0
        %472 = vmatpush1.msra.mxu0 0.0
        %473 = vmatprep.subr.mxu0 0.0
        %474 = vmatpush1.msra.mxu0 0.0
        %475 = vmatprep.subr.mxu0 0.0
        %476 = vmatpush1.msra.mxu0 0.0
        %477 = vmatprep.subr.mxu0 0.0
        %478 = vmatpush1.msra.mxu0 0.0
        %479 = vmatprep.subr.mxu0 0.0
        %480 = vmatpush1.msra.mxu0 0.0
        %481 = vmatprep.subr.mxu0 0.0
        %482 = vmatpush1.msra.mxu0 0.0
        %483 = vmatprep.subr.mxu0 0.0
        %484 = vmatpush1.msra.mxu0 0.0
        %485 = vmatprep.subr.mxu0 0.0
        %486 = vmatpush1.msra.mxu0 0.0
        %487 = vmatprep.subr.mxu0 0.0
        %488 = vmatpush1.msra.mxu0 0.0
        %489 = vmatprep.subr.mxu0 0.0
        %490 = vmatpush1.msra.mxu0 0.0
        %491 = vmatprep.mubr.f32.mxu0 0.0
        %492 = vmatmul.mubr.f32.gmra.mrb[0].mxu0 %v269
        %v493 = vpop.f32.mrb[0].mxu0
        %v494 = vadd.f32 %v347, %v493
        %v495 = vpop.f32.mrb[0].mxu0
        %v496 = vadd.f32 %v351, %v495
        %497 = vdwg.mxu0
        %v498 = vmul.f32 %v423, 0.5
        %v499 = vmul.f32 %v425, 0.5
        %v500 = vmul.f32 %v494, 0.5
        %v501 = vmul.f32 %v496, 0.5
        %v502 = vmul.f32 %v423, 0.70710677
        %v503 = vmul.f32 %v425, 0.70710677
        %v504 = vmul.f32 %v494, 0.70710677
        %v505 = vmul.f32 %v496, 0.70710677
        %v506 = verf.f32.pop %v502
        %v507 = verf.f32.pop %v503
        %v508 = verf.f32.pop %v504
        %v509 = verf.f32.pop %v505
        %v510 = vadd.f32 %v506, 1.0
        %v511 = vadd.f32 %v507, 1.0
        %v512 = vadd.f32 %v508, 1.0
        %v513 = vadd.f32 %v509, 1.0
        %v514 = vmul.f32 %v498, %v510
        %v515 = vmul.f32 %v499, %v511
        %v516 = vmul.f32 %v500, %v512
        %v517 = vmul.f32 %v501, %v513
        %v518 = vld [vmem:[#allocation7] sm:$0xff]
        %v519 = vld [vmem:[#allocation7 + $0x8] sm:$0xff]
        %v520 = vld [vmem:[#allocation7 + $0x10] sm:$0xff]
        %v521 = vld [vmem:[#allocation7 + $0x18] sm:$0xff]
        %v522 = vld [vmem:[#allocation7 + $0x20] sm:$0xff]
        %v523 = vld [vmem:[#allocation7 + $0x28] sm:$0xff]
        %v524 = vld [vmem:[#allocation7 + $0x30] sm:$0xff]
        %v525 = vld [vmem:[#allocation7 + $0x38] sm:$0xff]
        %v526 = vld [vmem:[#allocation7 + $0x40] sm:$0xff]
        %v527 = vld [vmem:[#allocation7 + $0x48] sm:$0xff]
        %v528 = vld [vmem:[#allocation7 + $0x50] sm:$0xff]
        %v529 = vld [vmem:[#allocation7 + $0x58] sm:$0xff]
        %v530 = vld [vmem:[#allocation7 + $0x60] sm:$0xff]
        %v531 = vld [vmem:[#allocation7 + $0x68] sm:$0xff]
        %v532 = vld [vmem:[#allocation7 + $0x70] sm:$0xff]
        %v533 = vld [vmem:[#allocation7 + $0x78] sm:$0xff]
        %v534 = vld [vmem:[#allocation7 + $0x80] sm:$0xff]
        %v535 = vld [vmem:[#allocation7 + $0x88] sm:$0xff]
        %v536 = vld [vmem:[#allocation7 + $0x90] sm:$0xff]
        %v537 = vld [vmem:[#allocation7 + $0x98] sm:$0xff]
        %v538 = vld [vmem:[#allocation7 + $0xa0] sm:$0xff]
        %v539 = vld [vmem:[#allocation7 + $0xa8] sm:$0xff]
        %v540 = vld [vmem:[#allocation7 + $0xb0] sm:$0xff]
        %v541 = vld [vmem:[#allocation7 + $0xb8] sm:$0xff]
        %v542 = vld [vmem:[#allocation7 + $0xc0] sm:$0xff]
        %v543 = vld [vmem:[#allocation7 + $0xc8] sm:$0xff]
        %v544 = vld [vmem:[#allocation7 + $0xd0] sm:$0xff]
        %v545 = vld [vmem:[#allocation7 + $0xd8] sm:$0xff]
        %v546 = vld [vmem:[#allocation7 + $0xe0] sm:$0xff]
        %v547 = vld [vmem:[#allocation7 + $0xe8] sm:$0xff]
        %v548 = vld [vmem:[#allocation7 + $0xf0] sm:$0xff]
        %v549 = vld [vmem:[#allocation7 + $0xf8] sm:$0xff]
        %v550 = vld [vmem:[#allocation7 + $0x100] sm:$0xff]
        %v551 = vld [vmem:[#allocation7 + $0x108] sm:$0xff]
        %v552 = vld [vmem:[#allocation7 + $0x110] sm:$0xff]
        %v553 = vld [vmem:[#allocation7 + $0x118] sm:$0xff]
        %v554 = vld [vmem:[#allocation7 + $0x120] sm:$0xff]
        %v555 = vld [vmem:[#allocation7 + $0x128] sm:$0xff]
        %v556 = vld [vmem:[#allocation7 + $0x130] sm:$0xff]
        %v557 = vld [vmem:[#allocation7 + $0x138] sm:$0xff]
        %v558 = vld [vmem:[#allocation7 + $0x140] sm:$0xff]
        %v559 = vld [vmem:[#allocation7 + $0x148] sm:$0xff]
        %v560 = vld [vmem:[#allocation7 + $0x150] sm:$0xff]
        %v561 = vld [vmem:[#allocation7 + $0x158] sm:$0xff]
        %v562 = vld [vmem:[#allocation7 + $0x160] sm:$0xff]
        %v563 = vld [vmem:[#allocation7 + $0x168] sm:$0xff]
        %v564 = vld [vmem:[#allocation7 + $0x170] sm:$0xff]
        %v565 = vld [vmem:[#allocation7 + $0x178] sm:$0xff]
        %v566 = vld [vmem:[#allocation7 + $0x180] sm:$0xff]
        %v567 = vld [vmem:[#allocation7 + $0x188] sm:$0xff]
        %v568 = vld [vmem:[#allocation7 + $0x190] sm:$0xff]
        %v569 = vld [vmem:[#allocation7 + $0x198] sm:$0xff]
        %v570 = vld [vmem:[#allocation7 + $0x1a0] sm:$0xff]
        %v571 = vld [vmem:[#allocation7 + $0x1a8] sm:$0xff]
        %v572 = vld [vmem:[#allocation7 + $0x1b0] sm:$0xff]
        %v573 = vld [vmem:[#allocation7 + $0x1b8] sm:$0xff]
        %v574 = vld [vmem:[#allocation7 + $0x1c0] sm:$0xff]
        %v575 = vld [vmem:[#allocation7 + $0x1c8] sm:$0xff]
        %v576 = vld [vmem:[#allocation7 + $0x1d0] sm:$0xff]
        %v577 = vld [vmem:[#allocation7 + $0x1d8] sm:$0xff]
        %v578 = vld [vmem:[#allocation7 + $0x1e0] sm:$0xff]
        %v579 = vld [vmem:[#allocation7 + $0x1e8] sm:$0xff]
        %v580 = vld [vmem:[#allocation7 + $0x1f0] sm:$0xff]
        %v581 = vld [vmem:[#allocation7 + $0x1f8] sm:$0xff]
        %v582 = vld [vmem:[%s4] sm:$0x1]
        %v584 = vlaneseq
        %v585 = vshrl.u32 %v584, 7
        %v586 = vsub.s32 0, %v585
        %v587 = vrot.slane %v582, %v586
        %589 = vmatprep.subr.mxu0 0.0
        %590 = vmatpush1.msra.mxu0 %v518
        %591 = vmatprep.subr.mxu0 0.0
        %592 = vmatpush1.msra.mxu0 %v519
        %593 = vmatprep.subr.mxu0 0.0
        %594 = vmatpush1.msra.mxu0 %v520
        %595 = vmatprep.subr.mxu0 0.0
        %596 = vmatpush1.msra.mxu0 %v521
        %597 = vmatprep.subr.mxu0 0.0
        %598 = vmatpush1.msra.mxu0 %v522
        %599 = vmatprep.subr.mxu0 0.0
        %600 = vmatpush1.msra.mxu0 %v523
        %601 = vmatprep.subr.mxu0 0.0
        %602 = vmatpush1.msra.mxu0 %v524
        %603 = vmatprep.subr.mxu0 0.0
        %604 = vmatpush1.msra.mxu0 %v525
        %605 = vmatprep.subr.mxu0 0.0
        %606 = vmatpush1.msra.mxu0 %v526
        %607 = vmatprep.subr.mxu0 0.0
        %608 = vmatpush1.msra.mxu0 %v527
        %609 = vmatprep.subr.mxu0 0.0
        %610 = vmatpush1.msra.mxu0 %v528
        %611 = vmatprep.subr.mxu0 0.0
        %612 = vmatpush1.msra.mxu0 %v529
        %613 = vmatprep.subr.mxu0 0.0
        %614 = vmatpush1.msra.mxu0 %v530
        %615 = vmatprep.subr.mxu0 0.0
        %616 = vmatpush1.msra.mxu0 %v531
        %617 = vmatprep.subr.mxu0 0.0
        %618 = vmatpush1.msra.mxu0 %v532
        %619 = vmatprep.subr.mxu0 0.0
        %620 = vmatpush1.msra.mxu0 %v533
        %621 = vmatprep.subr.mxu0 0.0
        %622 = vmatpush1.msra.mxu0 %v534
        %623 = vmatprep.subr.mxu0 0.0
        %624 = vmatpush1.msra.mxu0 %v535
        %625 = vmatprep.subr.mxu0 0.0
        %626 = vmatpush1.msra.mxu0 %v536
        %627 = vmatprep.subr.mxu0 0.0
        %628 = vmatpush1.msra.mxu0 %v537
        %629 = vmatprep.subr.mxu0 0.0
        %630 = vmatpush1.msra.mxu0 %v538
        %631 = vmatprep.subr.mxu0 0.0
        %632 = vmatpush1.msra.mxu0 %v539
        %633 = vmatprep.subr.mxu0 0.0
        %634 = vmatpush1.msra.mxu0 %v540
        %635 = vmatprep.subr.mxu0 0.0
        %636 = vmatpush1.msra.mxu0 %v541
        %637 = vmatprep.subr.mxu0 0.0
        %638 = vmatpush1.msra.mxu0 %v542
        %639 = vmatprep.subr.mxu0 0.0
        %640 = vmatpush1.msra.mxu0 %v543
        %641 = vmatprep.subr.mxu0 0.0
        %642 = vmatpush1.msra.mxu0 %v544
        %643 = vmatprep.subr.mxu0 0.0
        %644 = vmatpush1.msra.mxu0 %v545
        %645 = vmatprep.subr.mxu0 0.0
        %646 = vmatpush1.msra.mxu0 %v546
        %647 = vmatprep.subr.mxu0 0.0
        %648 = vmatpush1.msra.mxu0 %v547
        %649 = vmatprep.subr.mxu0 0.0
        %650 = vmatpush1.msra.mxu0 %v548
        %651 = vmatprep.subr.mxu0 0.0
        %652 = vmatpush1.msra.mxu0 %v549
        %653 = vmatprep.mubr.f32.mxu0 %v515
        %654 = vmatmul.mubr.f32.gmra.mrb[0].mxu0 %v514
        %v655 = vpop.f32.mrb[0].mxu0
        %v656 = vadd.f32 %v587, %v655
        %v657 = vpop.f32.mrb[0].mxu0
        %658 = vdwg.mxu0
        %659 = vmatprep.subr.mxu0 0.0
        %660 = vmatpush1.msra.mxu0 %v550
        %661 = vmatprep.subr.mxu0 0.0
        %662 = vmatpush1.msra.mxu0 %v551
        %663 = vmatprep.subr.mxu0 0.0
        %664 = vmatpush1.msra.mxu0 %v552
        %665 = vmatprep.subr.mxu0 0.0
        %666 = vmatpush1.msra.mxu0 %v553
        %667 = vmatprep.subr.mxu0 0.0
        %668 = vmatpush1.msra.mxu0 %v554
        %669 = vmatprep.subr.mxu0 0.0
        %670 = vmatpush1.msra.mxu0 %v555
        %671 = vmatprep.subr.mxu0 0.0
        %672 = vmatpush1.msra.mxu0 %v556
        %673 = vmatprep.subr.mxu0 0.0
        %674 = vmatpush1.msra.mxu0 %v557
        %675 = vmatprep.subr.mxu0 0.0
        %676 = vmatpush1.msra.mxu0 %v558
        %677 = vmatprep.subr.mxu0 0.0
        %678 = vmatpush1.msra.mxu0 %v559
        %679 = vmatprep.subr.mxu0 0.0
        %680 = vmatpush1.msra.mxu0 %v560
        %681 = vmatprep.subr.mxu0 0.0
        %682 = vmatpush1.msra.mxu0 %v561
        %683 = vmatprep.subr.mxu0 0.0
        %684 = vmatpush1.msra.mxu0 %v562
        %685 = vmatprep.subr.mxu0 0.0
        %686 = vmatpush1.msra.mxu0 %v563
        %687 = vmatprep.subr.mxu0 0.0
        %688 = vmatpush1.msra.mxu0 %v564
        %689 = vmatprep.subr.mxu0 0.0
        %690 = vmatpush1.msra.mxu0 %v565
        %691 = vmatprep.subr.mxu0 0.0
        %692 = vmatpush1.msra.mxu0 %v566
        %693 = vmatprep.subr.mxu0 0.0
        %694 = vmatpush1.msra.mxu0 %v567
        %695 = vmatprep.subr.mxu0 0.0
        %696 = vmatpush1.msra.mxu0 %v568
        %697 = vmatprep.subr.mxu0 0.0
        %698 = vmatpush1.msra.mxu0 %v569
        %699 = vmatprep.subr.mxu0 0.0
        %700 = vmatpush1.msra.mxu0 %v570
        %701 = vmatprep.subr.mxu0 0.0
        %702 = vmatpush1.msra.mxu0 %v571
        %703 = vmatprep.subr.mxu0 0.0
        %704 = vmatpush1.msra.mxu0 %v572
        %705 = vmatprep.subr.mxu0 0.0
        %706 = vmatpush1.msra.mxu0 %v573
        %707 = vmatprep.subr.mxu0 0.0
        %708 = vmatpush1.msra.mxu0 %v574
        %709 = vmatprep.subr.mxu0 0.0
        %710 = vmatpush1.msra.mxu0 %v575
        %711 = vmatprep.subr.mxu0 0.0
        %712 = vmatpush1.msra.mxu0 %v576
        %713 = vmatprep.subr.mxu0 0.0
        %714 = vmatpush1.msra.mxu0 %v577
        %715 = vmatprep.subr.mxu0 0.0
        %716 = vmatpush1.msra.mxu0 %v578
        %717 = vmatprep.subr.mxu0 0.0
        %718 = vmatpush1.msra.mxu0 %v579
        %719 = vmatprep.subr.mxu0 0.0
        %720 = vmatpush1.msra.mxu0 %v580
        %721 = vmatprep.subr.mxu0 0.0
        %722 = vmatpush1.msra.mxu0 %v581
        %723 = vmatprep.mubr.f32.mxu0 %v517
        %724 = vmatmul.mubr.f32.gmra.mrb[0].mxu0 %v516
        %v725 = vpop.f32.mrb[0].mxu0
        %v726 = vadd.f32 %v656, %v725
        %v727 = vpop.f32.mrb[0].mxu0
        %728 = vdwg.mxu0
        %729 = vst [vmem:[%s268] sm:$0xff] %v726
        %s730 = sand.u32 %s141, 1
        %s731 = scalar_lea.sflag [#allocation4], %s730
        %s732 = sand.u32 %s141, 1
        %s733 = smul.addr %s732, 8
        %s734 = scalar_lea.vmem [#allocation8], %s733
        // Predicated region
        $region53: #{mlp_forward.1} parent=39 // pred_check
          %p735 = pneg %p151
        $region54: #{mlp_forward.1} parent=39 // pred_check_branch
          %737 = sbr.rel (%p735) target = $region56
        $region55: #{mlp_forward.1} parent=39 // pred_region
          %s739 = ssub.s32 128, 128
          %740 = vsyncadd %s731, %s739
          %s741 = smul.addr %s23, 128
          %s742 = scalar_lea.hbm %s5, %s741
          %s744 = sshll.u32 %s734, 4
          %s745 = int_to_ptr.vmem [resolvable:$true] %s744
          %747 = dma.vmem_to_hbm [thread:$0]  %s745, 128, %s742, %s731
        $region56: #{mlp_forward.1} parent=39 // pred_fallthru
          _
      $region40: #{mlp_forward.1} parent=5 // pred_fallthru
        _
      %p748 = scmp.le.s32.totalorder 2, %s18
      // Predicated region
      $region57: #{mlp_forward.1} parent=5 // pred_check
        %p749 = pneg %p748
      $region58: #{mlp_forward.1} parent=5 // pred_check_branch
        %751 = sbr.rel (%p749) target = $region60
      $region59: #{mlp_forward.1} parent=5 // pred_region
        %s752 = ssub.s32 %s18, 2
        // Predicated region
        $region61: #{mlp_forward.1} parent=59 // pred_check
          %p753 = pneg %p157
        $region62: #{mlp_forward.1} parent=59 // pred_check_branch
          %755 = sbr.rel (%p753) target = $region64
        $region63: #{mlp_forward.1} parent=59 // pred_region
          %s756 = sand.u32 %s142, 1
          %s757 = scalar_lea.sflag [#allocation4], %s756
          %s758 = sand.u32 %s142, 1
          %s759 = smul.addr %s758, 8
          %s760 = scalar_lea.vmem [#allocation8], %s759
          %761 = dma.done %s757, 128
        $region64: #{mlp_forward.1} parent=59 // pred_fallthru
          _
      $region60: #{mlp_forward.1} parent=5 // pred_fallthru
        _
    $region6: #{mlp_forward.1} parent=1 // loop_footer
      %s22 = sadd.s32 1, %s18
    $region7: #{mlp_forward.1} parent=1 // loop_footer_branch
      %17 = sbr.rel target = $region3
    $region8: #{mlp_forward.1} parent=1 // loop_exit
      _
    %762 = vsyncpa [#allocation3], 1
    %s763 = scalar_lea.sflag [#allocation3], 1
    %764 = vsyncpa %s763, 1
    %765 = vsyncpa [#allocation6], 1
    %766 = vsyncpa [#allocation4], 1
    %s767 = scalar_lea.sflag [#allocation4], 1
    %768 = vsyncpa %s767, 1

</llo_original>
